<compile_context>
chip_gen: v7x
topology: tpu7x:2x2x1
jax: 0.10.0
libtpu: 0.0.40
codegen_flags: <defaults>
</compile_context>

<pallas_src>
import jax
import jax.numpy as jnp
from jax import lax
from jax.experimental import pallas as pl
from jax.experimental.pallas import tpu as pltpu


def _round_up(x, m):
    return (x + m - 1) // m * m


def _value_mlp_kernel(z_ref, w1_ref, b1_ref, w2_ref, b2_ref, w3_ref, b3_ref,
                      o_ref):
    # z_ref : (TB, F)    bf16  streamed batch chunk
    # w1_ref: (F, 256)   bf16  VMEM-resident (constant index map)
    # b1_ref: (1, 256)   f32
    # w2_ref: (256, 128) bf16
    # b2_ref: (1, 128)   f32
    # w3_ref: (8, 128)   f32   last-layer weights, row-replicated x8
    # b3_ref: (1, 1)     f32   SMEM scalar
    # o_ref : (1, TB)    f32   lane-dense output row for this chunk

    # Linear(F, 256) + ReLU   (bf16 MXU matmul, f32 accumulate / element-wise)
    h = jnp.dot(z_ref[...], w1_ref[...],
                preferred_element_type=jnp.float32) + b1_ref[...]
    h = jnp.maximum(h, 0.0)                                     # (TB, 256) f32

    # Linear(256, 128) + ReLU
    h = jnp.dot(h.astype(jnp.bfloat16), w2_ref[...],
                preferred_element_type=jnp.float32) + b2_ref[...]
    h = jnp.maximum(h, 0.0)                                     # (TB, 128) f32

    # Linear(128, 1): contract over the 128 features with the batch on the MXU N
    # axis (trans-B dot_general), so the result is a lane-dense (1, TB) row
    # instead of a lane-sparse (TB, 1) column -> unmasked stores.  w3 is
    # replicated to 8 rows so the LHS is a full sublane tile; row 0 is the answer.
    # Kept in f32 (near-f32 MXU passes) to stay close to the f32 PyTorch layer.
    v8 = lax.dot_general(w3_ref[...], h, (((1,), (1,)), ((), ())),
                         preferred_element_type=jnp.float32)    # (8, TB) f32
    o_ref[...] = v8[0:1, :] + b3_ref[0, 0]                      # (1, TB)


def value_mlp_forward(z, params, *, tb=None):
    """z: (B, n_features), ideally already bfloat16 (produced at the source).
    params: (w1, b1, w2, b2, w3, b3) float32 with shapes
        w1 (F, 256), b1 (1, 256), w2 (256, 128), b2 (1, 128), w3 (128, 1), b3 (1, 1).
    Returns (B, 1) float32."""
    w1, b1, w2, b2, w3, b3 = params
    B, F = z.shape
    H1 = w1.shape[1]
    H2 = w2.shape[1]

    if z.dtype != jnp.bfloat16:
        # NOTE: callers should build z in bf16 at the source (bf16 embedding
        # tables) so this cast does not add a separate HBM read+write pass.
        z = z.astype(jnp.bfloat16)

    # Batch tile: large default so each grid step does enough work to hide the
    # fixed per-step pipeline overhead.  VMEM at tb=2048, F~272 is only ~8 MiB
    # (double-buffered bf16 z + f32 activations + ~0.2 MiB resident weights),
    # well inside scoped limits on v5e/v6e/v7x.  Keep >= 2 grid steps when B
    # allows so both v7x TensorCores get work.
    if tb is None:
        tb = 2048
    tb = min(tb, _round_up(B, 8))
    tb = max(8, _round_up(tb, 8))
    if B > 8 and pl.cdiv(B, tb) < 2:
        tb = max(8, _round_up(pl.cdiv(B, 2), 8))
    num_chunks = pl.cdiv(B, tb)

    # bf16 MXU operands; biases / element-wise stay f32.
    w1_bf = w1.astype(jnp.bfloat16)
    w2_bf = w2.astype(jnp.bfloat16)
    b1_r = b1.reshape(1, H1).astype(jnp.float32)
    b2_r = b2.reshape(1, H2).astype(jnp.float32)
    w3_rep = jnp.tile(w3.reshape(1, H2).astype(jnp.float32), (8, 1))  # (8, 128)
    b3_s = b3.reshape(1, 1).astype(jnp.float32)

    out = pl.pallas_call(
        _value_mlp_kernel,
        out_shape=jax.ShapeDtypeStruct((num_chunks, 1, tb), jnp.float32),
        grid=(num_chunks,),
        in_specs=[
            # streamed batch chunk; no wrapper-side pad copy — the partial last
            # block (if B % tb != 0) is handled by Pallas boundary masking and
            # its garbage tail rows are discarded by the slice below (rows are
            # independent, so this is safe).
            pl.BlockSpec((tb, F), lambda i: (i, 0)),
            # weights / biases: constant index maps -> VMEM-resident across grid
            pl.BlockSpec((F, H1), lambda i: (0, 0)),
            pl.BlockSpec((1, H1), lambda i: (0, 0)),
            pl.BlockSpec((H1, H2), lambda i: (0, 0)),
            pl.BlockSpec((1, H2), lambda i: (0, 0)),
            pl.BlockSpec((8, H2), lambda i: (0, 0)),
            # scalar bias in SMEM (no padded (8,128) VMEM tile for one float)
            pl.BlockSpec(memory_space=pltpu.MemorySpace.SMEM),
        ],
        # lane-dense output: one (1, tb) row per chunk
        out_specs=pl.BlockSpec((None, 1, tb), lambda i: (i, 0, 0)),
        compiler_params=pltpu.CompilerParams(
            dimension_semantics=("parallel",)),   # megacore / 2-TC sharding
    )(z, w1_bf, b1_r, w2_bf, b2_r, w3_rep, b3_s)

    return out.reshape(-1)[:B].reshape(B, 1)


if __name__ == "__main__":
    key = jax.random.PRNGKey(0)

    # synthetic "gym_env" configuration (small shapes)
    VOCAB, EMB = 20, 4
    B = 16
    NAME_SHAPE = (4, 4, 2, 2)        # observation_space['name']
    INV = 4                          # observation_space['inv'][0]
    N_FEATURES = (NAME_SHAPE[0] * NAME_SHAPE[1] * NAME_SHAPE[2] * NAME_SHAPE[3]
                  + INV) * EMB       # = 272

    keys = jax.random.split(key, 10)
    # bf16 embedding tables -> z is produced in bf16 at the source (halves the
    # dominant HBM stream feeding the kernel); matmul accumulation stays f32.
    name_emb_table = (0.1 * jax.random.normal(keys[0], (VOCAB, EMB),
                                              jnp.float32)).astype(jnp.bfloat16)
    inv_emb_table = (0.1 * jax.random.normal(keys[1], (VOCAB, EMB),
                                             jnp.float32)).astype(jnp.bfloat16)
    w1 = 0.1 * jax.random.normal(keys[2], (N_FEATURES, 256), jnp.float32)
    b1 = 0.1 * jax.random.normal(keys[3], (1, 256), jnp.float32)
    w2 = 0.1 * jax.random.normal(keys[4], (256, 128), jnp.float32)
    b2 = 0.1 * jax.random.normal(keys[5], (1, 128), jnp.float32)
    w3 = 0.1 * jax.random.normal(keys[6], (128, 1), jnp.float32)
    b3 = 0.1 * jax.random.normal(keys[7], (1, 1), jnp.float32)
    params = (w1, b1, w2, b2, w3, b3)

    # deterministic integer observations
    name_ids = jax.random.randint(keys[8], (B,) + NAME_SHAPE, 0, VOCAB)
    inv_ids = jax.random.randint(keys[9], (B, INV), 0, VOCAB)

    # glue (plain JAX): embedding lookups + flatten + concat, mirroring the
    # reshape(B, -1) / cat of the PyTorch forward, already in bf16.
    # TODO(synk): fusing the tiny-table embedding gather into the kernel (pass
    # ids + tables, build z in VMEM) would cut the streamed bytes another ~4-8x,
    # but the E=4 gather/merge-reshape has no robust Mosaic lowering today.
    x = name_emb_table[name_ids].reshape(B, -1)
    inv = inv_emb_table[inv_ids].reshape(B, -1)
    z = jnp.concatenate([x, inv], axis=1)        # (B, 272) bf16

    v = jax.block_until_ready(value_mlp_forward(z, params))

    # pure-JAX reference replicating the kernel's bf16-matmul / f32-accumulate
    # path (the kernel matches the f32 PyTorch module only to ~bf16 precision).
    def ref_forward(zz):
        h = jnp.dot(zz, w1.astype(jnp.bfloat16),
                    preferred_element_type=jnp.float32) + b1
        h = jnp.maximum(h, 0.0)
        h = jnp.dot(h.astype(jnp.bfloat16), w2.astype(jnp.bfloat16),
                    preferred_element_type=jnp.float32) + b2
        h = jnp.maximum(h, 0.0)
        return jnp.dot(h, w3, preferred_element_type=jnp.float32) + b3

    ref_v = jax.block_until_ready(ref_forward(z))
    assert v.shape == (B, 1), v.shape
    assert jnp.allclose(v, ref_v, rtol=2e-2, atol=2e-2), (v, ref_v)
    print("KERNEL_OK")
</pallas_src>

<mosaic_0001>
module attributes {stable_mosaic.version = 11 : i64} {
  func.func @_value_mlp_kernel(%arg0: i32, %arg1: memref<8x272xbf16, #tpu.memory_space<vmem>>, %arg2: memref<272x256xbf16, #tpu.memory_space<vmem>>, %arg3: memref<1x256xf32, #tpu.memory_space<vmem>>, %arg4: memref<256x128xbf16, #tpu.memory_space<vmem>>, %arg5: memref<1x128xf32, #tpu.memory_space<vmem>>, %arg6: memref<8x128xf32, #tpu.memory_space<vmem>>, %arg7: memref<1x1xf32, #tpu.memory_space<smem>>, %arg8: memref<1x1x8xf32, #tpu.memory_space<vmem>>) attributes {dimension_semantics = [#tpu.dimension_semantics<parallel>], iteration_bounds = array<i64: 2>, scalar_prefetch = 0 : i64, scratch_operands = 0 : i64, tpu.core_type = #tpu.core_type<tc>, window_params = [{transform_indices = @transform_0, window_bounds = array<i64: 8, 272>}, {pipeline_mode = #tpu.pipeline_mode<synchronous>, transform_indices = @transform_1, window_bounds = array<i64: 272, 256>}, {pipeline_mode = #tpu.pipeline_mode<synchronous>, transform_indices = @transform_2, window_bounds = array<i64: 1, 256>}, {pipeline_mode = #tpu.pipeline_mode<synchronous>, transform_indices = @transform_3, window_bounds = array<i64: 256, 128>}, {pipeline_mode = #tpu.pipeline_mode<synchronous>, transform_indices = @transform_4, window_bounds = array<i64: 1, 128>}, {pipeline_mode = #tpu.pipeline_mode<synchronous>, transform_indices = @transform_5, window_bounds = array<i64: 8, 128>}, {transform_indices = @transform_6, window_bounds = array<i64: 1, 1>}, {transform_indices = @transform_7, window_bounds = array<i64: 1, 1, 8>}]} {
    %c0 = arith.constant 0 : index
    %c0_0 = arith.constant 0 : index
    %0 = vector.load %arg1[%c0, %c0_0] : memref<8x272xbf16, #tpu.memory_space<vmem>>, vector<8x272xbf16>
    %c0_1 = arith.constant 0 : index
    %c0_2 = arith.constant 0 : index
    %1 = vector.load %arg2[%c0_1, %c0_2] : memref<272x256xbf16, #tpu.memory_space<vmem>>, vector<272x256xbf16>
    %cst = arith.constant dense<0.000000e+00> : vector<8x256xf32>
    %2 = tpu.matmul %0, %1, %cst {dimension_numbers = #tpu.dot_dimension_numbers<[1], [0], [0], [1], [0, 0, 1, 1], [], []>} : vector<8x272xbf16>, vector<272x256xbf16>, vector<8x256xf32> -> vector<8x256xf32>
    %c0_3 = arith.constant 0 : index
    %c0_4 = arith.constant 0 : index
    %3 = vector.load %arg3[%c0_3, %c0_4] : memref<1x256xf32, #tpu.memory_space<vmem>>, vector<1x256xf32>
    %4 = vector.broadcast %3 : vector<1x256xf32> to vector<8x256xf32>
    %5 = arith.addf %2, %4 : vector<8x256xf32>
    %cst_5 = arith.constant 0.000000e+00 : f32
    %6 = vector.broadcast %cst_5 : f32 to vector<8x256xf32>
    %7 = arith.maximumf %5, %6 : vector<8x256xf32>
    %8 = arith.truncf %7 : vector<8x256xf32> to vector<8x256xbf16>
    %c0_6 = arith.constant 0 : index
    %c0_7 = arith.constant 0 : index
    %9 = vector.load %arg4[%c0_6, %c0_7] : memref<256x128xbf16, #tpu.memory_space<vmem>>, vector<256x128xbf16>
    %cst_8 = arith.constant dense<0.000000e+00> : vector<8x128xf32>
    %10 = tpu.matmul %8, %9, %cst_8 {dimension_numbers = #tpu.dot_dimension_numbers<[1], [0], [0], [1], [0, 0, 1, 1], [], []>} : vector<8x256xbf16>, vector<256x128xbf16>, vector<8x128xf32> -> vector<8x128xf32>
    %c0_9 = arith.constant 0 : index
    %c0_10 = arith.constant 0 : index
    %11 = vector.load %arg5[%c0_9, %c0_10] : memref<1x128xf32, #tpu.memory_space<vmem>>, vector<1x128xf32>
    %12 = vector.broadcast %11 : vector<1x128xf32> to vector<8x128xf32>
    %13 = arith.addf %10, %12 : vector<8x128xf32>
    %cst_11 = arith.constant 0.000000e+00 : f32
    %14 = vector.broadcast %cst_11 : f32 to vector<8x128xf32>
    %15 = arith.maximumf %13, %14 : vector<8x128xf32>
    %c0_12 = arith.constant 0 : index
    %c0_13 = arith.constant 0 : index
    %16 = vector.load %arg6[%c0_12, %c0_13] : memref<8x128xf32, #tpu.memory_space<vmem>>, vector<8x128xf32>
    %cst_14 = arith.constant dense<0.000000e+00> : vector<8x8xf32>
    %17 = tpu.matmul %16, %15, %cst_14 {dimension_numbers = #tpu.dot_dimension_numbers<[1], [1], [0], [0], [0, 0, 1, 0], [], []>} : vector<8x128xf32>, vector<8x128xf32>, vector<8x8xf32> -> vector<8x8xf32>
    %18 = vector.extract_strided_slice %17 {offsets = [0, 0], sizes = [1, 8], strides = [1, 1]} : vector<8x8xf32> to vector<1x8xf32>
    %c0_15 = arith.constant 0 : index
    %c0_16 = arith.constant 0 : index
    %19 = memref.load %arg7[%c0_15, %c0_16] : memref<1x1xf32, #tpu.memory_space<smem>>
    %20 = vector.broadcast %19 : f32 to vector<1x8xf32>
    %21 = arith.addf %18, %20 : vector<1x8xf32>
    %c0_17 = arith.constant 0 : index
    %c0_18 = arith.constant 0 : index
    %c0_19 = arith.constant 0 : index
    %22 = vector.load %arg8[%c0_17, %c0_18, %c0_19] : memref<1x1x8xf32, #tpu.memory_space<vmem>>, vector<1x1x8xf32>
    %23 = vector.shape_cast %22 : vector<1x1x8xf32> to vector<1x8xf32>
    %24 = vector.shape_cast %21 : vector<1x8xf32> to vector<1x1x8xf32>
    tpu.vector_store %arg8[%c0_17, %c0_18, %c0_19], %24 {strides = array<i32>} : memref<1x1x8xf32, #tpu.memory_space<vmem>>, vector<1x1x8xf32>,
    return
  }
  func.func @transform_0(%arg0: i32) -> (i32, i32) {
    %c0_i32 = arith.constant 0 : i32
    %c0_i32_0 = arith.constant 0 : i32
    return %arg0, %c0_i32 : i32, i32
  }
  func.func @transform_1(%arg0: i32) -> (i32, i32) {
    %c0_i32 = arith.constant 0 : i32
    %c0_i32_0 = arith.constant 0 : i32
    %c0_i32_1 = arith.constant 0 : i32
    return %c0_i32, %c0_i32_0 : i32, i32
  }
  func.func @transform_2(%arg0: i32) -> (i32, i32) {
    %c0_i32 = arith.constant 0 : i32
    %c0_i32_0 = arith.constant 0 : i32
    %c0_i32_1 = arith.constant 0 : i32
    return %c0_i32, %c0_i32_0 : i32, i32
  }
  func.func @transform_3(%arg0: i32) -> (i32, i32) {
    %c0_i32 = arith.constant 0 : i32
    %c0_i32_0 = arith.constant 0 : i32
    %c0_i32_1 = arith.constant 0 : i32
    return %c0_i32, %c0_i32_0 : i32, i32
  }
  func.func @transform_4(%arg0: i32) -> (i32, i32) {
    %c0_i32 = arith.constant 0 : i32
    %c0_i32_0 = arith.constant 0 : i32
    %c0_i32_1 = arith.constant 0 : i32
    return %c0_i32, %c0_i32_0 : i32, i32
  }
  func.func @transform_5(%arg0: i32) -> (i32, i32) {
    %c0_i32 = arith.constant 0 : i32
    %c0_i32_0 = arith.constant 0 : i32
    %c0_i32_1 = arith.constant 0 : i32
    return %c0_i32, %c0_i32_0 : i32, i32
  }
  func.func @transform_6(%arg0: i32) -> (i32, i32) {
    %c0_i32 = arith.constant 0 : i32
    %c0_i32_0 = arith.constant 0 : i32
    %c0_i32_1 = arith.constant 0 : i32
    return %c0_i32, %c0_i32_0 : i32, i32
  }
  func.func @transform_7(%arg0: i32) -> (i32, i32, i32) {
    %c0_i32 = arith.constant 0 : i32
    %c0_i32_0 = arith.constant 0 : i32
    %c0_i32_1 = arith.constant 0 : i32
    return %arg0, %c0_i32, %c0_i32_0 : i32, i32, i32
  }
}

</mosaic_0001>

<llo_original>
// kernel: tpu_custom_call.1
$region0: #{tpu_custom_call.1}
  #allocation0 [shape = 'u32[]', space=smem, size = 0x4, offset = 0x4, fixed_abs, tag = 'smem constant byte address 0x4 - core index']
  #allocation1 [shape = 'u32[144,128]{1,0:T(1,128)}', space=vmem, size = 0x12000, scoped, tag = 'internal scratch']
  #allocation2 [shape = 'f32[1,1]{1,0:T(1,128)S(6)}', space=smem, size = 0x200, scoped, tag = 'scoped memory for tpu_custom_call.1']
  %s0 = inlined_call_operand.hbm [shape: bf16[16,272], index: 0, kind: input, shape index: {}]
  %s1 = inlined_call_operand.hbm [shape: bf16[272,256], index: 1, kind: input, shape index: {}]
  %s2 = inlined_call_operand.vmem [shape: f32[1,256], index: 2, kind: input, shape index: {}]
  %s3 = inlined_call_operand.hbm [shape: bf16[256,128], index: 3, kind: input, shape index: {}]
  %s4 = inlined_call_operand.vmem [shape: f32[1,128], index: 4, kind: input, shape index: {}]
  %s5 = inlined_call_operand.vmem [shape: f32[8,128], index: 5, kind: input, shape index: {}]
  %s6 = inlined_call_operand.<no memory space> [shape: f32[1,1], index: 6, kind: input, shape index: {}]
  %s7 = inlined_call_operand.hbm [shape: f32[2,1,8], index: 7, kind: output, shape index: {}]
  %s8 = sld [smem:[#allocation0]]
  $region73: #{tpu_custom_call.1} parent=0
    _
  %s10 = ssub.s32 1, %s8
  %s11 = scalar_select 0, %s10, %s8
  %12 = sst [smem:[#allocation2]] %s6
  $region1: #{tpu_custom_call.1} parent=0
    #allocation3 [shape = 'u8[12288]{0}', space=vmem, size = 0x3000, scoped, tag = 'input window, operand 0']
    #allocation4 [shape = 's32[2]{0}', space=sflag, size = 0x8, scoped, tag = 'scoped memory for tpu_custom_call.1']
    #allocation5 [shape = 's32[2]{0}', space=sflag, size = 0x8, scoped, tag = 'scoped memory for tpu_custom_call.1']
    #allocation6 [shape = 'u8[139264]{0}', space=vmem, size = 0x22000, scoped, tag = 'input window, operand 1, single buffered']
    #allocation7 [shape = 's32[1]{0}', space=sflag, size = 0x4, scoped, tag = 'scoped memory for tpu_custom_call.1']
    #allocation8 [shape = 'u8[65536]{0}', space=vmem, size = 0x10000, scoped, tag = 'input window, operand 3, single buffered']
    #allocation9 [shape = 'u8[1024]{0}', space=vmem, size = 0x400, scoped, tag = 'output window, operand 0']
    %13 = vsyncpa [#allocation4], 0
    %s14 = scalar_lea.sflag [#allocation4], 1
    %15 = vsyncpa %s14, 0
    %16 = vsyncpa [#allocation7], 0
    %17 = vsyncpa [#allocation5], 0
    %s18 = scalar_lea.sflag [#allocation5], 1
    %19 = vsyncpa %s18, 0
    loop: start=0, step=1, limit=4
    $region2: #{tpu_custom_call.1} parent=1 // loop_pre_header
      _
    $region3: #{tpu_custom_call.1} parent=1 // loop_header
      %s21 = sphi 0, %s25
      %p22 = scmp.ge.s32.totalorder %s21, 4
      %s31 = sphi 0, %s33
      %s34 = sphi 0, %s31
      %s35 = sphi 0, %s34
      %s51 = sphi 0, %s35
      %s55 = sphi 0, %s55
      %s57 = sphi 0, %s55
      %s58 = sphi 0, %s57
      %s72 = sphi 0, %s58
      %s76 = sphi 0, %s76
      %s78 = sphi 0, %s76
      %s79 = sphi 0, %s78
      %s93 = sphi 0, %s79
      %s97 = sphi 0, %s97
      %s99 = sphi 0, %s97
      %s100 = sphi 0, %s99
      %s114 = sphi 0, %s100
      %s118 = sphi 0, %s118
      %s120 = sphi 0, %s118
      %s121 = sphi 0, %s120
      %s135 = sphi 0, %s121
      %s139 = sphi 0, %s139
      %s141 = sphi 0, %s139
      %s142 = sphi 0, %s141
      %s156 = sphi 0, %s142
      %s160 = sphi 0, %s160
      %s162 = sphi 0, %s160
      %s163 = sphi 0, %s162
      %s177 = sphi 0, %s163
      %s183 = sphi 0, %s185
      %s186 = sphi 0, %s183
      %s187 = sphi 0, %s186
      %s203 = sphi 0, %s187
    $region4: #{tpu_custom_call.1} parent=1 // loop_header_branch
      %24 = sbr.rel (%p22) target = $region8
    $region5: #{tpu_custom_call.1} parent=1 // loop_body
      %s26 = ssub.s32 %s21, 1
      %s27 = ssub.s32 %s21, 2
      %s28 = sadd.s32 %s21, 1
      %s29 = ssub.s32 %s21, %s28
      %p30 = scmp.eq.s32.totalorder %s29, 0
      %s32 = sadd.s32 %s31, 1
      %s33 = scalar_select %p30, %s31, %s32
      %p36 = pneg %p30
      %p37 = scmp.eq.s32.totalorder %s21, 1
      %p38 = por %p36, %p37
      %p39 = scmp.ne.s32.totalorder %s31, %s34
      %p40 = scmp.eq.s32.totalorder %s21, 0
      %p41 = por %p39, %p40
      %p42 = scmp.ne.s32.totalorder %s31, %s34
      %p43 = scmp.eq.s32.totalorder %s26, 1
      %p44 = por %p42, %p43
      %p45 = scmp.ne.s32.totalorder %s34, %s35
      %p46 = scmp.eq.s32.totalorder %s26, 0
      %p47 = por %p45, %p46
      %p48 = scmp.ne.s32.totalorder %s34, %s35
      %p49 = scmp.eq.s32.totalorder %s27, 1
      %p50 = por %p48, %p49
      %p52 = scmp.ne.s32.totalorder %s35, %s51
      %p53 = scmp.eq.s32.totalorder %s27, 0
      %p54 = por %p52, %p53
      %s56 = sadd.s32 %s55, 1
      %p59 = scmp.eq.s32.totalorder %s21, 1
      %p60 = scmp.ne.s32.totalorder %s55, %s57
      %p61 = scmp.eq.s32.totalorder %s21, 0
      %p62 = por %p60, %p61
      %p63 = scmp.ne.s32.totalorder %s55, %s57
      %p64 = scmp.eq.s32.totalorder %s26, 1
      %p65 = por %p63, %p64
      %p66 = scmp.ne.s32.totalorder %s57, %s58
      %p67 = scmp.eq.s32.totalorder %s26, 0
      %p68 = por %p66, %p67
      %p69 = scmp.ne.s32.totalorder %s57, %s58
      %p70 = scmp.eq.s32.totalorder %s27, 1
      %p71 = por %p69, %p70
      %p73 = scmp.ne.s32.totalorder %s58, %s72
      %p74 = scmp.eq.s32.totalorder %s27, 0
      %p75 = por %p73, %p74
      %s77 = sadd.s32 %s76, 1
      %p80 = scmp.eq.s32.totalorder %s21, 1
      %p81 = scmp.ne.s32.totalorder %s76, %s78
      %p82 = scmp.eq.s32.totalorder %s21, 0
      %p83 = por %p81, %p82
      %p84 = scmp.ne.s32.totalorder %s76, %s78
      %p85 = scmp.eq.s32.totalorder %s26, 1
      %p86 = por %p84, %p85
      %p87 = scmp.ne.s32.totalorder %s78, %s79
      %p88 = scmp.eq.s32.totalorder %s26, 0
      %p89 = por %p87, %p88
      %p90 = scmp.ne.s32.totalorder %s78, %s79
      %p91 = scmp.eq.s32.totalorder %s27, 1
      %p92 = por %p90, %p91
      %p94 = scmp.ne.s32.totalorder %s79, %s93
      %p95 = scmp.eq.s32.totalorder %s27, 0
      %p96 = por %p94, %p95
      %s98 = sadd.s32 %s97, 1
      %p101 = scmp.eq.s32.totalorder %s21, 1
      %p102 = scmp.ne.s32.totalorder %s97, %s99
      %p103 = scmp.eq.s32.totalorder %s21, 0
      %p104 = por %p102, %p103
      %p105 = scmp.ne.s32.totalorder %s97, %s99
      %p106 = scmp.eq.s32.totalorder %s26, 1
      %p107 = por %p105, %p106
      %p108 = scmp.ne.s32.totalorder %s99, %s100
      %p109 = scmp.eq.s32.totalorder %s26, 0
      %p110 = por %p108, %p109
      %p111 = scmp.ne.s32.totalorder %s99, %s100
      %p112 = scmp.eq.s32.totalorder %s27, 1
      %p113 = por %p111, %p112
      %p115 = scmp.ne.s32.totalorder %s100, %s114
      %p116 = scmp.eq.s32.totalorder %s27, 0
      %p117 = por %p115, %p116
      %s119 = sadd.s32 %s118, 1
      %p122 = scmp.eq.s32.totalorder %s21, 1
      %p123 = scmp.ne.s32.totalorder %s118, %s120
      %p124 = scmp.eq.s32.totalorder %s21, 0
      %p125 = por %p123, %p124
      %p126 = scmp.ne.s32.totalorder %s118, %s120
      %p127 = scmp.eq.s32.totalorder %s26, 1
      %p128 = por %p126, %p127
      %p129 = scmp.ne.s32.totalorder %s120, %s121
      %p130 = scmp.eq.s32.totalorder %s26, 0
      %p131 = por %p129, %p130
      %p132 = scmp.ne.s32.totalorder %s120, %s121
      %p133 = scmp.eq.s32.totalorder %s27, 1
      %p134 = por %p132, %p133
      %p136 = scmp.ne.s32.totalorder %s121, %s135
      %p137 = scmp.eq.s32.totalorder %s27, 0
      %p138 = por %p136, %p137
      %s140 = sadd.s32 %s139, 1
      %p143 = scmp.eq.s32.totalorder %s21, 1
      %p144 = scmp.ne.s32.totalorder %s139, %s141
      %p145 = scmp.eq.s32.totalorder %s21, 0
      %p146 = por %p144, %p145
      %p147 = scmp.ne.s32.totalorder %s139, %s141
      %p148 = scmp.eq.s32.totalorder %s26, 1
      %p149 = por %p147, %p148
      %p150 = scmp.ne.s32.totalorder %s141, %s142
      %p151 = scmp.eq.s32.totalorder %s26, 0
      %p152 = por %p150, %p151
      %p153 = scmp.ne.s32.totalorder %s141, %s142
      %p154 = scmp.eq.s32.totalorder %s27, 1
      %p155 = por %p153, %p154
      %p157 = scmp.ne.s32.totalorder %s142, %s156
      %p158 = scmp.eq.s32.totalorder %s27, 0
      %p159 = por %p157, %p158
      %s161 = sadd.s32 %s160, 1
      %p164 = scmp.eq.s32.totalorder %s21, 1
      %p165 = scmp.ne.s32.totalorder %s160, %s162
      %p166 = scmp.eq.s32.totalorder %s21, 0
      %p167 = por %p165, %p166
      %p168 = scmp.ne.s32.totalorder %s160, %s162
      %p169 = scmp.eq.s32.totalorder %s26, 1
      %p170 = por %p168, %p169
      %p171 = scmp.ne.s32.totalorder %s162, %s163
      %p172 = scmp.eq.s32.totalorder %s26, 0
      %p173 = por %p171, %p172
      %p174 = scmp.ne.s32.totalorder %s162, %s163
      %p175 = scmp.eq.s32.totalorder %s27, 1
      %p176 = por %p174, %p175
      %p178 = scmp.ne.s32.totalorder %s163, %s177
      %p179 = scmp.eq.s32.totalorder %s27, 0
      %p180 = por %p178, %p179
      %s181 = ssub.s32 %s21, %s28
      %p182 = scmp.eq.s32.totalorder %s181, 0
      %s184 = sadd.s32 %s183, 1
      %s185 = scalar_select %p182, %s183, %s184
      %p188 = pneg %p182
      %p189 = scmp.eq.s32.totalorder %s21, 1
      %p190 = por %p188, %p189
      %p191 = scmp.ne.s32.totalorder %s183, %s186
      %p192 = scmp.eq.s32.totalorder %s21, 0
      %p193 = por %p191, %p192
      %p194 = scmp.ne.s32.totalorder %s183, %s186
      %p195 = scmp.eq.s32.totalorder %s26, 1
      %p196 = por %p194, %p195
      %p197 = scmp.ne.s32.totalorder %s186, %s187
      %p198 = scmp.eq.s32.totalorder %s26, 0
      %p199 = por %p197, %p198
      %p200 = scmp.ne.s32.totalorder %s186, %s187
      %p201 = scmp.eq.s32.totalorder %s27, 1
      %p202 = por %p200, %p201
      %p204 = scmp.ne.s32.totalorder %s187, %s203
      %p205 = scmp.eq.s32.totalorder %s27, 0
      %p206 = por %p204, %p205
      %p207 = scmp.le.s32.totalorder 1, %s21
      %p208 = scmp.lt.s32.totalorder %s21, 3
      %p209 = pnand %p207, %p208
      %p210 = pneg %p209
      // Predicated region
      $region9: #{tpu_custom_call.1} parent=5 // pred_check
        _
      $region10: #{tpu_custom_call.1} parent=5 // pred_check_branch
        %212 = sbr.rel (%p209) target = $region12
      $region11: #{tpu_custom_call.1} parent=5 // pred_region
        %s213 = ssub.s32 %s21, 1
        // Predicated region
        $region13: #{tpu_custom_call.1} parent=11 // pred_check
          %p214 = pneg %p68
        $region14: #{tpu_custom_call.1} parent=11 // pred_check_branch
          %216 = sbr.rel (%p214) target = $region16
        $region15: #{tpu_custom_call.1} parent=11 // pred_region
          %s218 = ssub.s32 4352, 4352
          %219 = vsyncadd [#allocation7], %s218
          %s220 = sshll.u32 [#allocation6], 4
          %s221 = int_to_ptr.vmem [resolvable:$true] %s220
          %226 = dma.hbm_to_vmem [thread:$0]  %s1, 4352, %s221, [#allocation7], 128, 128, 8
        $region16: #{tpu_custom_call.1} parent=11 // pred_fallthru
          _
        // Predicated region
        $region17: #{tpu_custom_call.1} parent=11 // pred_check
          %p227 = pneg %p89
        $region18: #{tpu_custom_call.1} parent=11 // pred_check_branch
          %229 = sbr.rel (%p227) target = $region20
        $region19: #{tpu_custom_call.1} parent=11 // pred_region
          _
        $region20: #{tpu_custom_call.1} parent=11 // pred_fallthru
          _
        // Predicated region
        $region21: #{tpu_custom_call.1} parent=11 // pred_check
          %p230 = pneg %p110
        $region22: #{tpu_custom_call.1} parent=11 // pred_check_branch
          %232 = sbr.rel (%p230) target = $region24
        $region23: #{tpu_custom_call.1} parent=11 // pred_region
          %s234 = ssub.s32 2048, 2048
          %235 = vsyncadd [#allocation7], %s234
          %s236 = sshll.u32 [#allocation8], 4
          %s237 = int_to_ptr.vmem [resolvable:$true] %s236
          %242 = dma.hbm_to_vmem [thread:$0]  %s3, 2048, %s237, [#allocation7], 64, 64, 4
        $region24: #{tpu_custom_call.1} parent=11 // pred_fallthru
          _
        // Predicated region
        $region25: #{tpu_custom_call.1} parent=11 // pred_check
          %p243 = pneg %p131
        $region26: #{tpu_custom_call.1} parent=11 // pred_check_branch
          %245 = sbr.rel (%p243) target = $region28
        $region27: #{tpu_custom_call.1} parent=11 // pred_region
          _
        $region28: #{tpu_custom_call.1} parent=11 // pred_fallthru
          _
        // Predicated region
        $region29: #{tpu_custom_call.1} parent=11 // pred_check
          %p246 = pneg %p152
        $region30: #{tpu_custom_call.1} parent=11 // pred_check_branch
          %248 = sbr.rel (%p246) target = $region32
        $region31: #{tpu_custom_call.1} parent=11 // pred_region
          _
        $region32: #{tpu_custom_call.1} parent=11 // pred_fallthru
          _
        // Predicated region
        $region33: #{tpu_custom_call.1} parent=11 // pred_check
          %p249 = pneg %p173
        $region34: #{tpu_custom_call.1} parent=11 // pred_check_branch
          %251 = sbr.rel (%p249) target = $region36
        $region35: #{tpu_custom_call.1} parent=11 // pred_region
          _
        $region36: #{tpu_custom_call.1} parent=11 // pred_fallthru
          _
      $region12: #{tpu_custom_call.1} parent=5 // pred_fallthru
        _
      %p252 = scmp.lt.s32.totalorder %s21, 2
      // Predicated region
      $region37: #{tpu_custom_call.1} parent=5 // pred_check
        %p253 = pneg %p252
      $region38: #{tpu_custom_call.1} parent=5 // pred_check_branch
        %255 = sbr.rel (%p253) target = $region40
      $region39: #{tpu_custom_call.1} parent=5 // pred_region
        // Predicated region
        $region41: #{tpu_custom_call.1} parent=39 // pred_check
          %p256 = pneg %p41
        $region42: #{tpu_custom_call.1} parent=39 // pred_check_branch
          %258 = sbr.rel (%p256) target = $region44
        $region43: #{tpu_custom_call.1} parent=39 // pred_region
          %s259 = sand.u32 %s31, 1
          %s260 = scalar_lea.sflag [#allocation4], %s259
          %s261 = sand.u32 %s31, 1
          %s262 = smul.addr %s261, 12
          %s263 = scalar_lea.vmem [#allocation3], %s262
          %s265 = ssub.s32 192, 192
          %266 = vsyncadd %s260, %s265
          %s267 = smul.addr %s21, 3
          %s268 = smul.addr %s267, 64
          %s269 = scalar_lea.hbm %s0, %s268
          %s271 = sshll.u32 %s263, 4
          %s272 = int_to_ptr.vmem [resolvable:$true] %s271
          %274 = dma.hbm_to_vmem [thread:$0]  %s269, 192, %s272, %s260
        $region44: #{tpu_custom_call.1} parent=39 // pred_fallthru
          _
      $region40: #{tpu_custom_call.1} parent=5 // pred_fallthru
        _
      %p275 = scmp.le.s32.totalorder 1, %s21
      %p276 = scmp.lt.s32.totalorder %s21, 3
      %p277 = pnand %p275, %p276
      %p278 = pneg %p277
      // Predicated region
      $region45: #{tpu_custom_call.1} parent=5 // pred_check
        _
      $region46: #{tpu_custom_call.1} parent=5 // pred_check_branch
        %280 = sbr.rel (%p277) target = $region48
      $region47: #{tpu_custom_call.1} parent=5 // pred_region
        %s281 = ssub.s32 %s21, 1
        %s282 = sand.u32 %s34, 1
        %s283 = scalar_lea.sflag [#allocation4], %s282
        %s284 = sand.u32 %s34, 1
        %s285 = smul.addr %s284, 12
        %s286 = scalar_lea.vmem [#allocation3], %s285
        // Predicated region
        $region49: #{tpu_custom_call.1} parent=47 // pred_check
          %p287 = pneg %p47
        $region50: #{tpu_custom_call.1} parent=47 // pred_check_branch
          %289 = sbr.rel (%p287) target = $region52
        $region51: #{tpu_custom_call.1} parent=47 // pred_region
          %290 = dma.done %s283, 192
        $region52: #{tpu_custom_call.1} parent=47 // pred_fallthru
          _
        // Predicated region
        $region53: #{tpu_custom_call.1} parent=47 // pred_check
          %p291 = pneg %p68
        $region54: #{tpu_custom_call.1} parent=47 // pred_check_branch
          %293 = sbr.rel (%p291) target = $region56
        $region55: #{tpu_custom_call.1} parent=47 // pred_region
          %294 = dma.done [#allocation7], 4352
        $region56: #{tpu_custom_call.1} parent=47 // pred_fallthru
          _
        // Predicated region
        $region57: #{tpu_custom_call.1} parent=47 // pred_check
          %p295 = pneg %p110
        $region58: #{tpu_custom_call.1} parent=47 // pred_check_branch
          %297 = sbr.rel (%p295) target = $region60
        $region59: #{tpu_custom_call.1} parent=47 // pred_region
          %298 = dma.done [#allocation7], 2048
        $region60: #{tpu_custom_call.1} parent=47 // pred_fallthru
          _
        %s299 = sand.u32 %s34, 1
        %s300 = scalar_lea.sflag [#allocation4], %s299
        %s301 = sand.u32 %s34, 1
        %s302 = smul.addr %s301, 12
        %s303 = scalar_lea.vmem [#allocation3], %s302
        %p304 = pneg %p47
        %p305 = pneg %p44
        %p306 = pneg %p68
        %p307 = pneg %p65
        %p308 = pneg %p89
        %p309 = pneg %p86
        %p310 = pneg %p110
        %p311 = pneg %p107
        %p312 = pneg %p131
        %p313 = pneg %p128
        %p314 = pneg %p152
        %p315 = pneg %p149
        %p316 = pneg %p173
        %p317 = pneg %p170
        %p318 = pneg %p199
        %p319 = pneg %p196
        %s320 = sand.u32 %s186, 1
        %s321 = scalar_lea.sflag [#allocation5], %s320
        %s322 = sand.u32 %s186, 1
        %s323 = scalar_lea.vmem [#allocation9], %s322
        %v325 = vld [vmem:[%s286] sm:$0xff]
        %v326 = vld [vmem:[%s286 + $0x8] sm:$0xf]
        %v327 = vld [vmem:[#allocation6] sm:$0xff]
        %v328 = vld [vmem:[#allocation6 + $0x8] sm:$0xff]
        %v329 = vld [vmem:[#allocation6 + $0x10] sm:$0xff]
        %v330 = vld [vmem:[#allocation6 + $0x18] sm:$0xff]
        %v331 = vld [vmem:[#allocation6 + $0x20] sm:$0xff]
        %v332 = vld [vmem:[#allocation6 + $0x28] sm:$0xff]
        %v333 = vld [vmem:[#allocation6 + $0x30] sm:$0xff]
        %v334 = vld [vmem:[#allocation6 + $0x38] sm:$0xff]
        %v335 = vld [vmem:[#allocation6 + $0x40] sm:$0xff]
        %v336 = vld [vmem:[#allocation6 + $0x48] sm:$0xff]
        %v337 = vld [vmem:[#allocation6 + $0x50] sm:$0xff]
        %v338 = vld [vmem:[#allocation6 + $0x58] sm:$0xff]
        %v339 = vld [vmem:[#allocation6 + $0x60] sm:$0xff]
        %v340 = vld [vmem:[#allocation6 + $0x68] sm:$0xff]
        %v341 = vld [vmem:[#allocation6 + $0x70] sm:$0xff]
        %v342 = vld [vmem:[#allocation6 + $0x78] sm:$0xff]
        %v343 = vld [vmem:[#allocation6 + $0x80] sm:$0xff]
        %v344 = vld [vmem:[#allocation6 + $0x88] sm:$0xff]
        %v345 = vld [vmem:[#allocation6 + $0x90] sm:$0xff]
        %v346 = vld [vmem:[#allocation6 + $0x98] sm:$0xff]
        %v347 = vld [vmem:[#allocation6 + $0xa0] sm:$0xff]
        %v348 = vld [vmem:[#allocation6 + $0xa8] sm:$0xff]
        %v349 = vld [vmem:[#allocation6 + $0xb0] sm:$0xff]
        %v350 = vld [vmem:[#allocation6 + $0xb8] sm:$0xff]
        %v351 = vld [vmem:[#allocation6 + $0xc0] sm:$0xff]
        %v352 = vld [vmem:[#allocation6 + $0xc8] sm:$0xff]
        %v353 = vld [vmem:[#allocation6 + $0xd0] sm:$0xff]
        %v354 = vld [vmem:[#allocation6 + $0xd8] sm:$0xff]
        %v355 = vld [vmem:[#allocation6 + $0xe0] sm:$0xff]
        %v356 = vld [vmem:[#allocation6 + $0xe8] sm:$0xff]
        %v357 = vld [vmem:[#allocation6 + $0xf0] sm:$0xff]
        %v358 = vld [vmem:[#allocation6 + $0xf8] sm:$0xff]
        %v359 = vld [vmem:[#allocation6 + $0x100] sm:$0xff]
        %v360 = vld [vmem:[#allocation6 + $0x108] sm:$0xff]
        %v361 = vld [vmem:[%s2] sm:$0x3]
        %v363 = vlaneseq
        %v364 = vshrl.u32 %v363, 7
        %v365 = vsub.s32 0, %v364
        %v366 = vrot.slane %v361, %v365
        %v367 = vlaneseq
        %v368 = vshrl.u32 %v367, 7
        %v369 = vsub.s32 1, %v368
        %v370 = vrot.slane %v361, %v369
        %v375 = vunpack.c.l.b16 %v325
        %v376 = vunpack.c.h.b16 %v325
        %v377 = vunpack.c.l.b16 %v326
        %v378 = vpack.c.b16 %v375, %v375
        %v379 = vpack.c.b16 %v376, %v376
        %v380 = vpack.c.b16 %v377, %v377
        %v417 = vunpack.c.l.b16 %v327
        %v418 = vunpack.c.h.b16 %v327
        %v419 = vunpack.c.l.b16 %v328
        %v420 = vunpack.c.h.b16 %v328
        %v421 = vunpack.c.l.b16 %v329
        %v422 = vunpack.c.h.b16 %v329
        %v423 = vunpack.c.l.b16 %v330
        %v424 = vunpack.c.h.b16 %v330
        %v425 = vunpack.c.l.b16 %v331
        %v426 = vunpack.c.h.b16 %v331
        %v427 = vunpack.c.l.b16 %v332
        %v428 = vunpack.c.h.b16 %v332
        %v429 = vunpack.c.l.b16 %v333
        %v430 = vunpack.c.h.b16 %v333
        %v431 = vunpack.c.l.b16 %v334
        %v432 = vunpack.c.h.b16 %v334
        %v433 = vunpack.c.l.b16 %v335
        %v434 = vunpack.c.h.b16 %v335
        %v435 = vunpack.c.l.b16 %v336
        %v436 = vunpack.c.h.b16 %v336
        %v437 = vunpack.c.l.b16 %v337
        %v438 = vunpack.c.h.b16 %v337
        %v439 = vunpack.c.l.b16 %v338
        %v440 = vunpack.c.h.b16 %v338
        %v441 = vunpack.c.l.b16 %v339
        %v442 = vunpack.c.h.b16 %v339
        %v443 = vunpack.c.l.b16 %v340
        %v444 = vunpack.c.h.b16 %v340
        %v445 = vunpack.c.l.b16 %v341
        %v446 = vunpack.c.h.b16 %v341
        %v447 = vunpack.c.l.b16 %v342
        %v448 = vunpack.c.h.b16 %v342
        %v449 = vunpack.c.l.b16 %v343
        %v450 = vunpack.c.h.b16 %v343
        %v451 = vunpack.c.l.b16 %v344
        %v452 = vunpack.c.h.b16 %v344
        %v453 = vunpack.c.l.b16 %v345
        %v454 = vunpack.c.h.b16 %v345
        %v455 = vunpack.c.l.b16 %v346
        %v456 = vunpack.c.h.b16 %v346
        %v457 = vunpack.c.l.b16 %v347
        %v458 = vunpack.c.h.b16 %v347
        %v459 = vunpack.c.l.b16 %v348
        %v460 = vunpack.c.h.b16 %v348
        %v461 = vunpack.c.l.b16 %v349
        %v462 = vunpack.c.h.b16 %v349
        %v463 = vunpack.c.l.b16 %v350
        %v464 = vunpack.c.h.b16 %v350
        %v465 = vunpack.c.l.b16 %v351
        %v466 = vunpack.c.h.b16 %v351
        %v467 = vunpack.c.l.b16 %v352
        %v468 = vunpack.c.h.b16 %v352
        %v469 = vunpack.c.l.b16 %v353
        %v470 = vunpack.c.h.b16 %v353
        %v471 = vunpack.c.l.b16 %v354
        %v472 = vunpack.c.h.b16 %v354
        %v473 = vunpack.c.l.b16 %v355
        %v474 = vunpack.c.h.b16 %v355
        %v475 = vunpack.c.l.b16 %v356
        %v476 = vunpack.c.h.b16 %v356
        %v477 = vunpack.c.l.b16 %v357
        %v478 = vunpack.c.h.b16 %v357
        %v479 = vunpack.c.l.b16 %v358
        %v480 = vunpack.c.h.b16 %v358
        %v481 = vunpack.c.l.b16 %v359
        %v482 = vunpack.c.h.b16 %v359
        %v483 = vunpack.c.l.b16 %v360
        %v484 = vunpack.c.h.b16 %v360
        %v485 = vpack.c.b16 %v419, %v417
        %v486 = vpack.c.b16 %v420, %v418
        %v487 = vpack.c.b16 %v423, %v421
        %v488 = vpack.c.b16 %v424, %v422
        %v489 = vpack.c.b16 %v427, %v425
        %v490 = vpack.c.b16 %v428, %v426
        %v491 = vpack.c.b16 %v431, %v429
        %v492 = vpack.c.b16 %v432, %v430
        %v493 = vpack.c.b16 %v435, %v433
        %v494 = vpack.c.b16 %v436, %v434
        %v495 = vpack.c.b16 %v439, %v437
        %v496 = vpack.c.b16 %v440, %v438
        %v497 = vpack.c.b16 %v443, %v441
        %v498 = vpack.c.b16 %v444, %v442
        %v499 = vpack.c.b16 %v447, %v445
        %v500 = vpack.c.b16 %v448, %v446
        %v501 = vpack.c.b16 %v451, %v449
        %v502 = vpack.c.b16 %v452, %v450
        %v503 = vpack.c.b16 %v455, %v453
        %v504 = vpack.c.b16 %v456, %v454
        %v505 = vpack.c.b16 %v459, %v457
        %v506 = vpack.c.b16 %v460, %v458
        %v507 = vpack.c.b16 %v463, %v461
        %v508 = vpack.c.b16 %v464, %v462
        %v509 = vpack.c.b16 %v467, %v465
        %v510 = vpack.c.b16 %v468, %v466
        %v511 = vpack.c.b16 %v471, %v469
        %v512 = vpack.c.b16 %v472, %v470
        %v513 = vpack.c.b16 %v475, %v473
        %v514 = vpack.c.b16 %v476, %v474
        %v515 = vpack.c.b16 %v479, %v477
        %v516 = vpack.c.b16 %v480, %v478
        %v517 = vpack.c.b16 %v483, %v481
        %v518 = vpack.c.b16 %v484, %v482
        %vm553 = vcmask 130048
        %v555 = vsel %vm553, %v380, 0
        %557 = vmatprep.subr.bf16.mxu0 %v486
        %558 = vmatpush1.bf16.msra.mxu0 %v485
        %559 = vmatprep.subr.bf16.mxu0 %v488
        %560 = vmatpush1.bf16.msra.mxu0 %v487
        %561 = vmatprep.subr.bf16.mxu0 %v490
        %562 = vmatpush1.bf16.msra.mxu0 %v489
        %563 = vmatprep.subr.bf16.mxu0 %v492
        %564 = vmatpush1.bf16.msra.mxu0 %v491
        %565 = vmatprep.subr.bf16.mxu0 %v494
        %566 = vmatpush1.bf16.msra.mxu0 %v493
        %567 = vmatprep.subr.bf16.mxu0 %v496
        %568 = vmatpush1.bf16.msra.mxu0 %v495
        %569 = vmatprep.subr.bf16.mxu0 %v498
        %570 = vmatpush1.bf16.msra.mxu0 %v497
        %571 = vmatprep.subr.bf16.mxu0 %v500
        %572 = vmatpush1.bf16.msra.mxu0 %v499
        %573 = vmatprep.subr.bf16.mxu0 %v502
        %574 = vmatpush1.bf16.msra.mxu0 %v501
        %575 = vmatprep.subr.bf16.mxu0 %v504
        %576 = vmatpush1.bf16.msra.mxu0 %v503
        %577 = vmatprep.subr.bf16.mxu0 %v506
        %578 = vmatpush1.bf16.msra.mxu0 %v505
        %579 = vmatprep.subr.bf16.mxu0 %v508
        %580 = vmatpush1.bf16.msra.mxu0 %v507
        %581 = vmatprep.subr.bf16.mxu0 %v510
        %582 = vmatpush1.bf16.msra.mxu0 %v509
        %583 = vmatprep.subr.bf16.mxu0 %v512
        %584 = vmatpush1.bf16.msra.mxu0 %v511
        %585 = vmatprep.subr.bf16.mxu0 %v514
        %586 = vmatpush1.bf16.msra.mxu0 %v513
        %587 = vmatprep.subr.bf16.mxu0 %v516
        %588 = vmatpush1.bf16.msra.mxu0 %v515
        %589 = vmatprep.mubr.bf16.mxu0 %v379
        %590 = vmatmul.mubr.bf16.gmra.mrb[0].mxu0 %v378
        %v591 = vpop.f32.mrb[0].mxu0
        %v592 = vadd.f32 %v366, %v591
        %v593 = vpop.f32.mrb[0].mxu0
        %v594 = vadd.f32 %v370, %v593
        %v595 = vpop.f32.mrb[0].mxu0
        %v596 = vpop.f32.mrb[0].mxu0
        %597 = vdwg.mxu0
        %598 = vmatprep.subr.bf16.mxu0 %v518
        %599 = vmatpush1.bf16.msra.mxu0 %v517
        %600 = vmatprep.subr.bf16.mxu0 0
        %601 = vmatpush1.bf16.msra.mxu0 0
        %602 = vmatprep.subr.bf16.mxu0 0
        %603 = vmatpush1.bf16.msra.mxu0 0
        %604 = vmatprep.subr.bf16.mxu0 0
        %605 = vmatpush1.bf16.msra.mxu0 0
        %606 = vmatprep.subr.bf16.mxu0 0
        %607 = vmatpush1.bf16.msra.mxu0 0
        %608 = vmatprep.subr.bf16.mxu0 0
        %609 = vmatpush1.bf16.msra.mxu0 0
        %610 = vmatprep.subr.bf16.mxu0 0
        %611 = vmatpush1.bf16.msra.mxu0 0
        %612 = vmatprep.subr.bf16.mxu0 0
        %613 = vmatpush1.bf16.msra.mxu0 0
        %614 = vmatprep.subr.bf16.mxu0 0
        %615 = vmatpush1.bf16.msra.mxu0 0
        %616 = vmatprep.subr.bf16.mxu0 0
        %617 = vmatpush1.bf16.msra.mxu0 0
        %618 = vmatprep.subr.bf16.mxu0 0
        %619 = vmatpush1.bf16.msra.mxu0 0
        %620 = vmatprep.subr.bf16.mxu0 0
        %621 = vmatpush1.bf16.msra.mxu0 0
        %622 = vmatprep.subr.bf16.mxu0 0
        %623 = vmatpush1.bf16.msra.mxu0 0
        %624 = vmatprep.subr.bf16.mxu0 0
        %625 = vmatpush1.bf16.msra.mxu0 0
        %626 = vmatprep.subr.bf16.mxu0 0
        %627 = vmatpush1.bf16.msra.mxu0 0
        %628 = vmatprep.subr.bf16.mxu0 0
        %629 = vmatpush1.bf16.msra.mxu0 0
        %630 = vmatprep.mubr.bf16.mxu0 0
        %631 = vmatmul.mubr.bf16.gmra.mrb[0].mxu0 %v555
        %v632 = vpop.f32.mrb[0].mxu0
        %v633 = vadd.f32 %v592, %v632
        %v634 = vpop.f32.mrb[0].mxu0
        %v635 = vadd.f32 %v594, %v634
        %v636 = vpop.f32.mrb[0].mxu0
        %v637 = vpop.f32.mrb[0].mxu0
        %638 = vdwg.mxu0
        %v639 = vmax.f32 %v633, 0.0
        %v640 = vmax.f32 %v635, 0.0
        %v641 = vpack.c.bf16 %v639, %v639
        %v642 = vpack.c.bf16 %v640, %v640
        %v643 = vld [vmem:[#allocation8] sm:$0xf]
        %v644 = vld [vmem:[#allocation8 + $0x4] sm:$0xf]
        %v645 = vld [vmem:[#allocation8 + $0x8] sm:$0xf]
        %v646 = vld [vmem:[#allocation8 + $0xc] sm:$0xf]
        %v647 = vld [vmem:[#allocation8 + $0x10] sm:$0xf]
        %v648 = vld [vmem:[#allocation8 + $0x14] sm:$0xf]
        %v649 = vld [vmem:[#allocation8 + $0x18] sm:$0xf]
        %v650 = vld [vmem:[#allocation8 + $0x1c] sm:$0xf]
        %v651 = vld [vmem:[#allocation8 + $0x20] sm:$0xf]
        %v652 = vld [vmem:[#allocation8 + $0x24] sm:$0xf]
        %v653 = vld [vmem:[#allocation8 + $0x28] sm:$0xf]
        %v654 = vld [vmem:[#allocation8 + $0x2c] sm:$0xf]
        %v655 = vld [vmem:[#allocation8 + $0x30] sm:$0xf]
        %v656 = vld [vmem:[#allocation8 + $0x34] sm:$0xf]
        %v657 = vld [vmem:[#allocation8 + $0x38] sm:$0xf]
        %v658 = vld [vmem:[#allocation8 + $0x3c] sm:$0xf]
        %v659 = vld [vmem:[#allocation8 + $0x40] sm:$0xf]
        %v660 = vld [vmem:[#allocation8 + $0x44] sm:$0xf]
        %v661 = vld [vmem:[#allocation8 + $0x48] sm:$0xf]
        %v662 = vld [vmem:[#allocation8 + $0x4c] sm:$0xf]
        %v663 = vld [vmem:[#allocation8 + $0x50] sm:$0xf]
        %v664 = vld [vmem:[#allocation8 + $0x54] sm:$0xf]
        %v665 = vld [vmem:[#allocation8 + $0x58] sm:$0xf]
        %v666 = vld [vmem:[#allocation8 + $0x5c] sm:$0xf]
        %v667 = vld [vmem:[#allocation8 + $0x60] sm:$0xf]
        %v668 = vld [vmem:[#allocation8 + $0x64] sm:$0xf]
        %v669 = vld [vmem:[#allocation8 + $0x68] sm:$0xf]
        %v670 = vld [vmem:[#allocation8 + $0x6c] sm:$0xf]
        %v671 = vld [vmem:[#allocation8 + $0x70] sm:$0xf]
        %v672 = vld [vmem:[#allocation8 + $0x74] sm:$0xf]
        %v673 = vld [vmem:[#allocation8 + $0x78] sm:$0xf]
        %v674 = vld [vmem:[#allocation8 + $0x7c] sm:$0xf]
        %v675 = vld [vmem:[%s4] sm:$0x1]
        %v677 = vlaneseq
        %v678 = vshrl.u32 %v677, 7
        %v679 = vsub.s32 0, %v678
        %v680 = vrot.slane %v675, %v679
        %v714 = vunpack.c.l.b16 %v643
        %v715 = vunpack.c.l.b16 %v644
        %v716 = vunpack.c.l.b16 %v645
        %v717 = vunpack.c.l.b16 %v646
        %v718 = vunpack.c.l.b16 %v647
        %v719 = vunpack.c.l.b16 %v648
        %v720 = vunpack.c.l.b16 %v649
        %v721 = vunpack.c.l.b16 %v650
        %v722 = vunpack.c.l.b16 %v651
        %v723 = vunpack.c.l.b16 %v652
        %v724 = vunpack.c.l.b16 %v653
        %v725 = vunpack.c.l.b16 %v654
        %v726 = vunpack.c.l.b16 %v655
        %v727 = vunpack.c.l.b16 %v656
        %v728 = vunpack.c.l.b16 %v657
        %v729 = vunpack.c.l.b16 %v658
        %v730 = vunpack.c.l.b16 %v659
        %v731 = vunpack.c.l.b16 %v660
        %v732 = vunpack.c.l.b16 %v661
        %v733 = vunpack.c.l.b16 %v662
        %v734 = vunpack.c.l.b16 %v663
        %v735 = vunpack.c.l.b16 %v664
        %v736 = vunpack.c.l.b16 %v665
        %v737 = vunpack.c.l.b16 %v666
        %v738 = vunpack.c.l.b16 %v667
        %v739 = vunpack.c.l.b16 %v668
        %v740 = vunpack.c.l.b16 %v669
        %v741 = vunpack.c.l.b16 %v670
        %v742 = vunpack.c.l.b16 %v671
        %v743 = vunpack.c.l.b16 %v672
        %v744 = vunpack.c.l.b16 %v673
        %v745 = vunpack.c.l.b16 %v674
        %v746 = vpack.c.b16 %v715, %v714
        %v747 = vpack.c.b16 %v717, %v716
        %v748 = vpack.c.b16 %v719, %v718
        %v749 = vpack.c.b16 %v721, %v720
        %v750 = vpack.c.b16 %v723, %v722
        %v751 = vpack.c.b16 %v725, %v724
        %v752 = vpack.c.b16 %v727, %v726
        %v753 = vpack.c.b16 %v729, %v728
        %v754 = vpack.c.b16 %v731, %v730
        %v755 = vpack.c.b16 %v733, %v732
        %v756 = vpack.c.b16 %v735, %v734
        %v757 = vpack.c.b16 %v737, %v736
        %v758 = vpack.c.b16 %v739, %v738
        %v759 = vpack.c.b16 %v741, %v740
        %v760 = vpack.c.b16 %v743, %v742
        %v761 = vpack.c.b16 %v745, %v744
        %778 = vmatprep.subr.bf16.mxu0 0
        %779 = vmatpush1.bf16.msra.mxu0 %v746
        %780 = vmatprep.subr.bf16.mxu0 0
        %781 = vmatpush1.bf16.msra.mxu0 %v747
        %782 = vmatprep.subr.bf16.mxu0 0
        %783 = vmatpush1.bf16.msra.mxu0 %v748
        %784 = vmatprep.subr.bf16.mxu0 0
        %785 = vmatpush1.bf16.msra.mxu0 %v749
        %786 = vmatprep.subr.bf16.mxu0 0
        %787 = vmatpush1.bf16.msra.mxu0 %v750
        %788 = vmatprep.subr.bf16.mxu0 0
        %789 = vmatpush1.bf16.msra.mxu0 %v751
        %790 = vmatprep.subr.bf16.mxu0 0
        %791 = vmatpush1.bf16.msra.mxu0 %v752
        %792 = vmatprep.subr.bf16.mxu0 0
        %793 = vmatpush1.bf16.msra.mxu0 %v753
        %794 = vmatprep.subr.bf16.mxu0 0
        %795 = vmatpush1.bf16.msra.mxu0 %v754
        %796 = vmatprep.subr.bf16.mxu0 0
        %797 = vmatpush1.bf16.msra.mxu0 %v755
        %798 = vmatprep.subr.bf16.mxu0 0
        %799 = vmatpush1.bf16.msra.mxu0 %v756
        %800 = vmatprep.subr.bf16.mxu0 0
        %801 = vmatpush1.bf16.msra.mxu0 %v757
        %802 = vmatprep.subr.bf16.mxu0 0
        %803 = vmatpush1.bf16.msra.mxu0 %v758
        %804 = vmatprep.subr.bf16.mxu0 0
        %805 = vmatpush1.bf16.msra.mxu0 %v759
        %806 = vmatprep.subr.bf16.mxu0 0
        %807 = vmatpush1.bf16.msra.mxu0 %v760
        %808 = vmatprep.subr.bf16.mxu0 0
        %809 = vmatpush1.bf16.msra.mxu0 %v761
        %810 = vmatprep.mubr.bf16.mxu0 %v642
        %811 = vmatmul.mubr.bf16.gmra.mrb[0].mxu0 %v641
        %v812 = vpop.f32.mrb[0].mxu0
        %v813 = vadd.f32 %v680, %v812
        %v814 = vpop.f32.mrb[0].mxu0
        %v815 = vpop.f32.mrb[0].mxu0
        %v816 = vpop.f32.mrb[0].mxu0
        %817 = vdwg.mxu0
        %v818 = vmax.f32 %v813, 0.0
        %v819 = vld [vmem:[%s5] sm:$0xff]
        %820 = vmatprep.subr.mxu0 0.0
        %821 = vmatpush1.xpose.msra.mxu0 %v818
        %822 = vmatprep.subr.mxu0 0.0
        %823 = vmatpush1.xpose.msra.mxu0 0.0
        %824 = vmatprep.subr.mxu0 0.0
        %825 = vmatpush1.xpose.msra.mxu0 0.0
        %826 = vmatprep.subr.mxu0 0.0
        %827 = vmatpush1.xpose.msra.mxu0 0.0
        %828 = vmatprep.subr.mxu0 0.0
        %829 = vmatpush1.xpose.msra.mxu0 0.0
        %830 = vmatprep.subr.mxu0 0.0
        %831 = vmatpush1.xpose.msra.mxu0 0.0
        %832 = vmatprep.subr.mxu0 0.0
        %833 = vmatpush1.xpose.msra.mxu0 0.0
        %834 = vmatprep.subr.mxu0 0.0
        %835 = vmatpush1.xpose.msra.mxu0 0.0
        %836 = vmatprep.subr.mxu0 0.0
        %837 = vmatpush1.xpose.msra.mxu0 0.0
        %838 = vmatprep.subr.mxu0 0.0
        %839 = vmatpush1.xpose.msra.mxu0 0.0
        %840 = vmatprep.subr.mxu0 0.0
        %841 = vmatpush1.xpose.msra.mxu0 0.0
        %842 = vmatprep.subr.mxu0 0.0
        %843 = vmatpush1.xpose.msra.mxu0 0.0
        %844 = vmatprep.subr.mxu0 0.0
        %845 = vmatpush1.xpose.msra.mxu0 0.0
        %846 = vmatprep.subr.mxu0 0.0
        %847 = vmatpush1.xpose.msra.mxu0 0.0
        %848 = vmatprep.subr.mxu0 0.0
        %849 = vmatpush1.xpose.msra.mxu0 0.0
        %850 = vmatprep.subr.mxu0 0.0
        %851 = vmatpush1.xpose.msra.mxu0 0.0
        %852 = vmatprep.subr.mxu0 0.0
        %853 = vmatpush1.xpose.msra.mxu0 0.0
        %854 = vmatprep.subr.mxu0 0.0
        %855 = vmatpush1.xpose.msra.mxu0 0.0
        %856 = vmatprep.subr.mxu0 0.0
        %857 = vmatpush1.xpose.msra.mxu0 0.0
        %858 = vmatprep.subr.mxu0 0.0
        %859 = vmatpush1.xpose.msra.mxu0 0.0
        %860 = vmatprep.subr.mxu0 0.0
        %861 = vmatpush1.xpose.msra.mxu0 0.0
        %862 = vmatprep.subr.mxu0 0.0
        %863 = vmatpush1.xpose.msra.mxu0 0.0
        %864 = vmatprep.subr.mxu0 0.0
        %865 = vmatpush1.xpose.msra.mxu0 0.0
        %866 = vmatprep.subr.mxu0 0.0
        %867 = vmatpush1.xpose.msra.mxu0 0.0
        %868 = vmatprep.subr.mxu0 0.0
        %869 = vmatpush1.xpose.msra.mxu0 0.0
        %870 = vmatprep.subr.mxu0 0.0
        %871 = vmatpush1.xpose.msra.mxu0 0.0
        %872 = vmatprep.subr.mxu0 0.0
        %873 = vmatpush1.xpose.msra.mxu0 0.0
        %874 = vmatprep.subr.mxu0 0.0
        %875 = vmatpush1.xpose.msra.mxu0 0.0
        %876 = vmatprep.subr.mxu0 0.0
        %877 = vmatpush1.xpose.msra.mxu0 0.0
        %878 = vmatprep.subr.mxu0 0.0
        %879 = vmatpush1.xpose.msra.mxu0 0.0
        %880 = vmatprep.subr.mxu0 0.0
        %881 = vmatpush1.xpose.msra.mxu0 0.0
        %882 = vmatprep.subr.mxu0 0.0
        %883 = vmatpush1.xpose.msra.mxu0 0.0
        %884 = vmatprep.mubr.f32.mxu0 0.0
        %885 = vmatmul.mubr.f32.gmra.mrb[0].mxu0 %v819
        %v886 = vpop.f32.mrb[0].mxu0
        %v887 = vadd.f32 0.0, %v886
        %v888 = vpop.f32.mrb[0].mxu0
        %889 = vdwg.mxu0
        %s890 = sld [smem:[#allocation2]]
        %v891 = vstv %s890
        %v892 = vadd.f32 %v887, %v891
        %vm893 = vcmask 57344
        %894 = vst.msk [vmem:[%s323] sm:$0x1] %vm893, %v892
        %s895 = sand.u32 %s186, 1
        %s896 = scalar_lea.sflag [#allocation5], %s895
        %s897 = sand.u32 %s186, 1
        %s898 = scalar_lea.vmem [#allocation9], %s897
        // Predicated region
        $region61: #{tpu_custom_call.1} parent=47 // pred_check
          %p899 = pneg %p196
        $region62: #{tpu_custom_call.1} parent=47 // pred_check_branch
          %901 = sbr.rel (%p899) target = $region64
        $region63: #{tpu_custom_call.1} parent=47 // pred_region
          %s903 = ssub.s32 16, 16
          %904 = vsyncadd %s896, %s903
          %s905 = smul.addr %s26, 16
          %s906 = scalar_lea.hbm %s7, %s905
          %s908 = sshll.u32 %s898, 4
          %s909 = int_to_ptr.vmem [resolvable:$true] %s908
          %911 = dma.vmem_to_hbm [thread:$0]  %s909, 16, %s906, %s896
        $region64: #{tpu_custom_call.1} parent=47 // pred_fallthru
          _
      $region48: #{tpu_custom_call.1} parent=5 // pred_fallthru
        _
      %p912 = scmp.le.s32.totalorder 2, %s21
      // Predicated region
      $region65: #{tpu_custom_call.1} parent=5 // pred_check
        %p913 = pneg %p912
      $region66: #{tpu_custom_call.1} parent=5 // pred_check_branch
        %915 = sbr.rel (%p913) target = $region68
      $region67: #{tpu_custom_call.1} parent=5 // pred_region
        %s916 = ssub.s32 %s21, 2
        // Predicated region
        $region69: #{tpu_custom_call.1} parent=67 // pred_check
          %p917 = pneg %p202
        $region70: #{tpu_custom_call.1} parent=67 // pred_check_branch
          %919 = sbr.rel (%p917) target = $region72
        $region71: #{tpu_custom_call.1} parent=67 // pred_region
          %s920 = sand.u32 %s187, 1
          %s921 = scalar_lea.sflag [#allocation5], %s920
          %s922 = sand.u32 %s187, 1
          %s923 = scalar_lea.vmem [#allocation9], %s922
          %924 = dma.done %s921, 16
        $region72: #{tpu_custom_call.1} parent=67 // pred_fallthru
          _
      $region68: #{tpu_custom_call.1} parent=5 // pred_fallthru
        _
    $region6: #{tpu_custom_call.1} parent=1 // loop_footer
      %s25 = sadd.s32 1, %s21
    $region7: #{tpu_custom_call.1} parent=1 // loop_footer_branch
      %20 = sbr.rel target = $region3
    $region8: #{tpu_custom_call.1} parent=1 // loop_exit
      _
    %925 = vsyncpa [#allocation4], 1
    %s926 = scalar_lea.sflag [#allocation4], 1
    %927 = vsyncpa %s926, 1
    %928 = vsyncpa [#allocation7], 1
    %929 = vsyncpa [#allocation5], 1
    %s930 = scalar_lea.sflag [#allocation5], 1
    %931 = vsyncpa %s930, 1

</llo_original>
